<compile_context>
chip_gen: v7x
topology: tpu7x:2x2x1
jax: 0.10.0
libtpu: 0.0.40
codegen_flags: <defaults>
</compile_context>

<pallas_src>
import jax
import jax.numpy as jnp
from jax.experimental import pallas as pl
from jax.experimental.pallas import tpu as pltpu


def _mlp3_kernel(x_ref,
                 w1_ref, b1_ref,
                 w2_ref, b2_ref,
                 w3_ref, b3_ref,
                 w4_ref, b4_ref,
                 o_ref):
    """Fused 4x (Linear) + 3x ReLU forward pass for one batch tile.

    x / weights arrive in the MXU compute dtype (bf16 by default). Every matmul
    accumulates in f32 (preferred_element_type); bias adds and ReLUs run in f32 on
    the VPU; the activation is cast back to the compute dtype for the next MXU push.
    """
    compute_dtype = w1_ref.dtype
    x = x_ref[...]

    # fc1 + relu1
    h = jnp.dot(x, w1_ref[...], preferred_element_type=jnp.float32) + b1_ref[...]
    h = jnp.maximum(h, 0.0).astype(compute_dtype)

    # fc2 + relu2
    h = jnp.dot(h, w2_ref[...], preferred_element_type=jnp.float32) + b2_ref[...]
    h = jnp.maximum(h, 0.0).astype(compute_dtype)

    # fc3 + relu3
    h = jnp.dot(h, w3_ref[...], preferred_element_type=jnp.float32) + b3_ref[...]
    h = jnp.maximum(h, 0.0).astype(compute_dtype)

    # fc4 (no activation) — keep the f32 accumulator for the store.
    h = jnp.dot(h, w4_ref[...], preferred_element_type=jnp.float32) + b4_ref[...]

    # TODO(synk): OUT(=16) < 128 lanes forces masked vst; a lane-dense
    # (tile//8, 128) repack would avoid that but costs an XLU shuffle — only
    # worth benchmarking in the large-B regime.
    o_ref[...] = h.astype(o_ref.dtype)


def _pick_batch_tile(batch, max_tile=512):
    """Largest multiple-of-8 divisor of `batch` not exceeding max_tile.

    Gives a multi-step grid for large batches (pipelining + v7x two-TC sharding)
    while keeping small batches as a single full tile.
    """
    if batch <= max_tile:
        return batch
    start = max_tile - (max_tile % 8)
    for t in range(start, 7, -8):
        if batch % t == 0:
            return t
    return batch


def fc_ff_nn_3layer(x, params, *, batch_tile=None,
                    compute_dtype=jnp.bfloat16,
                    vmem_limit_bytes=32 * 1024 * 1024):
    """Pallas forward of FC_FF_NN_3LAYER.

    x: [B, input_size] float32
    params: dict with w1..w4 ([in, out]) and b1..b4 ([1, out]) float32
    """
    B, in_dim = x.shape
    if batch_tile is None:
        batch_tile = _pick_batch_tile(B)
    assert B % batch_tile == 0, "batch_tile must divide the batch size"
    assert batch_tile == B or batch_tile % 8 == 0, (
        "batch_tile must be a multiple of 8 (sublane tiling) or the full batch")

    out_dim = params["w4"].shape[1]
    grid = (B // batch_tile,)

    # HBM-heavy operands (x, weights) in the MXU compute dtype; biases stay f32
    # and are added onto the f32 accumulator inside the kernel.
    x_c = x.astype(compute_dtype)
    ws = [params[f"w{i}"].astype(compute_dtype) for i in range(1, 5)]
    bs = [params[f"b{i}"].astype(jnp.float32) for i in range(1, 5)]

    # Weights / biases are fully resident and constant across the grid:
    # single-buffer them so no second VMEM buffer gets allocated.
    def const_spec(shape):
        return pl.BlockSpec(shape, lambda i: (0,) * len(shape),
                            pipeline_mode=pl.Buffered(buffer_count=1))

    in_specs = [pl.BlockSpec((batch_tile, in_dim), lambda i: (i, 0))]
    for w, b in zip(ws, bs):
        in_specs.append(const_spec(w.shape))
        in_specs.append(const_spec(b.shape))
    out_specs = pl.BlockSpec((batch_tile, out_dim), lambda i: (i, 0))

    # --- VMEM budget sanity check (v7x has only 64 MiB physical VMEM). ---
    itemsize = jnp.dtype(compute_dtype).itemsize
    param_bytes = (sum(w.size * itemsize for w in ws)          # single-buffered
                   + sum(b.size * 4 for b in bs))
    io_bytes = (2 * batch_tile * in_dim * itemsize             # double-buffered x tile
                + 2 * batch_tile * out_dim * 4)                # double-buffered out tile
    max_hidden = max(w.shape[1] for w in ws)
    live_bytes = 2 * batch_tile * (max_hidden + in_dim) * 4    # f32 intermediates
    vmem_needed = param_bytes + io_bytes + live_bytes
    assert vmem_needed < vmem_limit_bytes, (
        f"tiling needs ~{vmem_needed} B VMEM > limit {vmem_limit_bytes}; "
        "shrink batch_tile or tile the hidden dims")

    flops = 2 * B * sum(w.shape[0] * w.shape[1] for w in ws)
    bytes_accessed = x_c.size * itemsize + param_bytes + B * out_dim * 4
    cost = pl.CostEstimate(flops=flops, transcendentals=0,
                           bytes_accessed=bytes_accessed)

    return pl.pallas_call(
        _mlp3_kernel,
        grid=grid,
        in_specs=in_specs,
        out_specs=out_specs,
        out_shape=jax.ShapeDtypeStruct((B, out_dim), jnp.float32),
        compiler_params=pltpu.CompilerParams(
            dimension_semantics=("parallel",),   # batch axis shards across v7x TCs
            vmem_limit_bytes=vmem_limit_bytes),
        cost_estimate=cost,
    )(x_c,
      ws[0], bs[0],
      ws[1], bs[1],
      ws[2], bs[2],
      ws[3], bs[3])


def init_params(key, input_size, h1, h2, h3, output_size):
    """Deterministic init mirroring nn.Linear (uniform(-1/sqrt(fan_in), 1/sqrt(fan_in)))."""
    sizes = [(input_size, h1), (h1, h2), (h2, h3), (h3, output_size)]
    params = {}
    for idx, (fan_in, fan_out) in enumerate(sizes, start=1):
        key, kw, kb = jax.random.split(key, 3)
        bound = 1.0 / jnp.sqrt(float(fan_in))
        params[f"w{idx}"] = jax.random.uniform(
            kw, (fan_in, fan_out), jnp.float32, -bound, bound)
        params[f"b{idx}"] = jax.random.uniform(
            kb, (1, fan_out), jnp.float32, -bound, bound)
    return params


def reference_forward(x, params, compute_dtype=jnp.float32):
    """Pure-JAX reference; compute_dtype mirrors the kernel's precision policy."""
    cd = compute_dtype
    h = x.astype(cd)
    for i in range(1, 4):
        h = jnp.dot(h, params[f"w{i}"].astype(cd),
                    preferred_element_type=jnp.float32) + params[f"b{i}"]
        h = jnp.maximum(h, 0.0).astype(cd)
    return jnp.dot(h, params["w4"].astype(cd),
                   preferred_element_type=jnp.float32) + params["b4"]


if __name__ == "__main__":
    # Small shapes consistent with the module's forward.
    B, INPUT, H1, H2, H3, OUT = 8, 32, 64, 64, 32, 16

    key = jax.random.PRNGKey(0)
    key, kx = jax.random.split(key)
    x = jax.random.normal(kx, (B, INPUT), jnp.float32)
    params = init_params(key, INPUT, H1, H2, H3, OUT)

    out = jax.block_until_ready(fc_ff_nn_3layer(x, params))
    assert out.shape == (B, OUT)

    # Tight check vs a precision-matched (bf16 inputs, f32 accumulation) reference.
    ref_bf16 = reference_forward(x, params, compute_dtype=jnp.bfloat16)
    assert jnp.allclose(out, ref_bf16, atol=2e-3, rtol=2e-3), "mismatch vs bf16 reference"

    # Loose sanity check vs the original full-f32 module semantics.
    ref_f32 = reference_forward(x, params, compute_dtype=jnp.float32)
    assert jnp.allclose(out, ref_f32, atol=1e-1, rtol=1e-1), "mismatch vs f32 reference"

    print("KERNEL_OK")
</pallas_src>

<mosaic_0001>
module attributes {stable_mosaic.version = 11 : i64} {
  func.func @_mlp3_kernel(%arg0: i32, %arg1: memref<8x32xbf16, #tpu.memory_space<vmem>>, %arg2: memref<32x64xbf16, #tpu.memory_space<vmem>>, %arg3: memref<1x64xf32, #tpu.memory_space<vmem>>, %arg4: memref<64x64xbf16, #tpu.memory_space<vmem>>, %arg5: memref<1x64xf32, #tpu.memory_space<vmem>>, %arg6: memref<64x32xbf16, #tpu.memory_space<vmem>>, %arg7: memref<1x32xf32, #tpu.memory_space<vmem>>, %arg8: memref<32x16xbf16, #tpu.memory_space<vmem>>, %arg9: memref<1x16xf32, #tpu.memory_space<vmem>>, %arg10: memref<8x16xf32, #tpu.memory_space<vmem>>) attributes {dimension_semantics = [#tpu.dimension_semantics<parallel>], iteration_bounds = array<i64: 1>, scalar_prefetch = 0 : i64, scratch_operands = 0 : i64, tpu.core_type = #tpu.core_type<tc>, window_params = [{transform_indices = @transform_0, window_bounds = array<i64: 8, 32>}, {pipeline_mode = #tpu.pipeline_mode<synchronous>, transform_indices = @transform_1, window_bounds = array<i64: 32, 64>}, {pipeline_mode = #tpu.pipeline_mode<synchronous>, transform_indices = @transform_2, window_bounds = array<i64: 1, 64>}, {pipeline_mode = #tpu.pipeline_mode<synchronous>, transform_indices = @transform_3, window_bounds = array<i64: 64, 64>}, {pipeline_mode = #tpu.pipeline_mode<synchronous>, transform_indices = @transform_4, window_bounds = array<i64: 1, 64>}, {pipeline_mode = #tpu.pipeline_mode<synchronous>, transform_indices = @transform_5, window_bounds = array<i64: 64, 32>}, {pipeline_mode = #tpu.pipeline_mode<synchronous>, transform_indices = @transform_6, window_bounds = array<i64: 1, 32>}, {pipeline_mode = #tpu.pipeline_mode<synchronous>, transform_indices = @transform_7, window_bounds = array<i64: 32, 16>}, {pipeline_mode = #tpu.pipeline_mode<synchronous>, transform_indices = @transform_8, window_bounds = array<i64: 1, 16>}, {transform_indices = @transform_9, window_bounds = array<i64: 8, 16>}]} {
    %c0 = arith.constant 0 : index
    %c0_0 = arith.constant 0 : index
    %0 = vector.load %arg1[%c0, %c0_0] : memref<8x32xbf16, #tpu.memory_space<vmem>>, vector<8x32xbf16>
    %c0_1 = arith.constant 0 : index
    %c0_2 = arith.constant 0 : index
    %1 = vector.load %arg2[%c0_1, %c0_2] : memref<32x64xbf16, #tpu.memory_space<vmem>>, vector<32x64xbf16>
    %cst = arith.constant dense<0.000000e+00> : vector<8x64xf32>
    %2 = tpu.matmul %0, %1, %cst {dimension_numbers = #tpu.dot_dimension_numbers<[1], [0], [0], [1], [0, 0, 1, 1], [], []>} : vector<8x32xbf16>, vector<32x64xbf16>, vector<8x64xf32> -> vector<8x64xf32>
    %c0_3 = arith.constant 0 : index
    %c0_4 = arith.constant 0 : index
    %3 = vector.load %arg3[%c0_3, %c0_4] : memref<1x64xf32, #tpu.memory_space<vmem>>, vector<1x64xf32>
    %4 = vector.broadcast %3 : vector<1x64xf32> to vector<8x64xf32>
    %5 = arith.addf %2, %4 : vector<8x64xf32>
    %cst_5 = arith.constant 0.000000e+00 : f32
    %6 = vector.broadcast %cst_5 : f32 to vector<8x64xf32>
    %7 = arith.maximumf %5, %6 : vector<8x64xf32>
    %8 = arith.truncf %7 : vector<8x64xf32> to vector<8x64xbf16>
    %c0_6 = arith.constant 0 : index
    %c0_7 = arith.constant 0 : index
    %9 = vector.load %arg4[%c0_6, %c0_7] : memref<64x64xbf16, #tpu.memory_space<vmem>>, vector<64x64xbf16>
    %cst_8 = arith.constant dense<0.000000e+00> : vector<8x64xf32>
    %10 = tpu.matmul %8, %9, %cst_8 {dimension_numbers = #tpu.dot_dimension_numbers<[1], [0], [0], [1], [0, 0, 1, 1], [], []>} : vector<8x64xbf16>, vector<64x64xbf16>, vector<8x64xf32> -> vector<8x64xf32>
    %c0_9 = arith.constant 0 : index
    %c0_10 = arith.constant 0 : index
    %11 = vector.load %arg5[%c0_9, %c0_10] : memref<1x64xf32, #tpu.memory_space<vmem>>, vector<1x64xf32>
    %12 = vector.broadcast %11 : vector<1x64xf32> to vector<8x64xf32>
    %13 = arith.addf %10, %12 : vector<8x64xf32>
    %cst_11 = arith.constant 0.000000e+00 : f32
    %14 = vector.broadcast %cst_11 : f32 to vector<8x64xf32>
    %15 = arith.maximumf %13, %14 : vector<8x64xf32>
    %16 = arith.truncf %15 : vector<8x64xf32> to vector<8x64xbf16>
    %c0_12 = arith.constant 0 : index
    %c0_13 = arith.constant 0 : index
    %17 = vector.load %arg6[%c0_12, %c0_13] : memref<64x32xbf16, #tpu.memory_space<vmem>>, vector<64x32xbf16>
    %cst_14 = arith.constant dense<0.000000e+00> : vector<8x32xf32>
    %18 = tpu.matmul %16, %17, %cst_14 {dimension_numbers = #tpu.dot_dimension_numbers<[1], [0], [0], [1], [0, 0, 1, 1], [], []>} : vector<8x64xbf16>, vector<64x32xbf16>, vector<8x32xf32> -> vector<8x32xf32>
    %c0_15 = arith.constant 0 : index
    %c0_16 = arith.constant 0 : index
    %19 = vector.load %arg7[%c0_15, %c0_16] : memref<1x32xf32, #tpu.memory_space<vmem>>, vector<1x32xf32>
    %20 = vector.broadcast %19 : vector<1x32xf32> to vector<8x32xf32>
    %21 = arith.addf %18, %20 : vector<8x32xf32>
    %cst_17 = arith.constant 0.000000e+00 : f32
    %22 = vector.broadcast %cst_17 : f32 to vector<8x32xf32>
    %23 = arith.maximumf %21, %22 : vector<8x32xf32>
    %24 = arith.truncf %23 : vector<8x32xf32> to vector<8x32xbf16>
    %c0_18 = arith.constant 0 : index
    %c0_19 = arith.constant 0 : index
    %25 = vector.load %arg8[%c0_18, %c0_19] : memref<32x16xbf16, #tpu.memory_space<vmem>>, vector<32x16xbf16>
    %cst_20 = arith.constant dense<0.000000e+00> : vector<8x16xf32>
    %26 = tpu.matmul %24, %25, %cst_20 {dimension_numbers = #tpu.dot_dimension_numbers<[1], [0], [0], [1], [0, 0, 1, 1], [], []>} : vector<8x32xbf16>, vector<32x16xbf16>, vector<8x16xf32> -> vector<8x16xf32>
    %c0_21 = arith.constant 0 : index
    %c0_22 = arith.constant 0 : index
    %27 = vector.load %arg9[%c0_21, %c0_22] : memref<1x16xf32, #tpu.memory_space<vmem>>, vector<1x16xf32>
    %28 = vector.broadcast %27 : vector<1x16xf32> to vector<8x16xf32>
    %29 = arith.addf %26, %28 : vector<8x16xf32>
    %c0_23 = arith.constant 0 : index
    %c0_24 = arith.constant 0 : index
    %30 = vector.load %arg10[%c0_23, %c0_24] : memref<8x16xf32, #tpu.memory_space<vmem>>, vector<8x16xf32>
    tpu.vector_store %arg10[%c0_23, %c0_24], %29 {strides = array<i32>} : memref<8x16xf32, #tpu.memory_space<vmem>>, vector<8x16xf32>,
    return
  }
  func.func @transform_0(%arg0: i32) -> (i32, i32) {
    %c0_i32 = arith.constant 0 : i32
    %c0_i32_0 = arith.constant 0 : i32
    return %arg0, %c0_i32 : i32, i32
  }
  func.func @transform_1(%arg0: i32) -> (i32, i32) {
    %c0_i32 = arith.constant 0 : i32
    %c0_i32_0 = arith.constant 0 : i32
    %c0_i32_1 = arith.constant 0 : i32
    return %c0_i32, %c0_i32_0 : i32, i32
  }
  func.func @transform_2(%arg0: i32) -> (i32, i32) {
    %c0_i32 = arith.constant 0 : i32
    %c0_i32_0 = arith.constant 0 : i32
    %c0_i32_1 = arith.constant 0 : i32
    return %c0_i32, %c0_i32_0 : i32, i32
  }
  func.func @transform_3(%arg0: i32) -> (i32, i32) {
    %c0_i32 = arith.constant 0 : i32
    %c0_i32_0 = arith.constant 0 : i32
    %c0_i32_1 = arith.constant 0 : i32
    return %c0_i32, %c0_i32_0 : i32, i32
  }
  func.func @transform_4(%arg0: i32) -> (i32, i32) {
    %c0_i32 = arith.constant 0 : i32
    %c0_i32_0 = arith.constant 0 : i32
    %c0_i32_1 = arith.constant 0 : i32
    return %c0_i32, %c0_i32_0 : i32, i32
  }
  func.func @transform_5(%arg0: i32) -> (i32, i32) {
    %c0_i32 = arith.constant 0 : i32
    %c0_i32_0 = arith.constant 0 : i32
    %c0_i32_1 = arith.constant 0 : i32
    return %c0_i32, %c0_i32_0 : i32, i32
  }
  func.func @transform_6(%arg0: i32) -> (i32, i32) {
    %c0_i32 = arith.constant 0 : i32
    %c0_i32_0 = arith.constant 0 : i32
    %c0_i32_1 = arith.constant 0 : i32
    return %c0_i32, %c0_i32_0 : i32, i32
  }
  func.func @transform_7(%arg0: i32) -> (i32, i32) {
    %c0_i32 = arith.constant 0 : i32
    %c0_i32_0 = arith.constant 0 : i32
    %c0_i32_1 = arith.constant 0 : i32
    return %c0_i32, %c0_i32_0 : i32, i32
  }
  func.func @transform_8(%arg0: i32) -> (i32, i32) {
    %c0_i32 = arith.constant 0 : i32
    %c0_i32_0 = arith.constant 0 : i32
    %c0_i32_1 = arith.constant 0 : i32
    return %c0_i32, %c0_i32_0 : i32, i32
  }
  func.func @transform_9(%arg0: i32) -> (i32, i32) {
    %c0_i32 = arith.constant 0 : i32
    %c0_i32_0 = arith.constant 0 : i32
    return %arg0, %c0_i32 : i32, i32
  }
}

</mosaic_0001>

<llo_original>
// kernel: tpu_custom_call.1
$region0: #{tpu_custom_call.1}
  #allocation0 [shape = 'u32[]', space=smem, size = 0x4, offset = 0x4, fixed_abs, tag = 'smem constant byte address 0x4 - core index']
  #allocation1 [shape = 'u32[144,128]{1,0:T(1,128)}', space=vmem, size = 0x12000, scoped, tag = 'internal scratch']
  %s0 = inlined_call_operand.vmem [shape: bf16[8,32], index: 0, kind: input, shape index: {}]
  %s1 = inlined_call_operand.vmem [shape: bf16[32,64], index: 1, kind: input, shape index: {}]
  %s2 = inlined_call_operand.vmem [shape: f32[1,64], index: 2, kind: input, shape index: {}]
  %s3 = inlined_call_operand.vmem [shape: bf16[64,64], index: 3, kind: input, shape index: {}]
  %s4 = inlined_call_operand.vmem [shape: f32[1,64], index: 4, kind: input, shape index: {}]
  %s5 = inlined_call_operand.vmem [shape: bf16[64,32], index: 5, kind: input, shape index: {}]
  %s6 = inlined_call_operand.vmem [shape: f32[1,32], index: 6, kind: input, shape index: {}]
  %s7 = inlined_call_operand.vmem [shape: bf16[32,16], index: 7, kind: input, shape index: {}]
  %s8 = inlined_call_operand.vmem [shape: f32[1,16], index: 8, kind: input, shape index: {}]
  %s9 = inlined_call_operand.hbm [shape: f32[8,16], index: 9, kind: output, shape index: {}]
  %s10 = sld [smem:[#allocation0]]
  $region46: #{tpu_custom_call.1} parent=0
    _
  %s12 = ssub.s32 1, %s10
  %s13 = scalar_select 0, %s12, %s10
  $region1: #{tpu_custom_call.1} parent=0
    #allocation2 [shape = 'u8[4096]{0}', space=vmem, size = 0x1000, scoped, tag = 'output window, operand 0, single buffered']
    #allocation3 [shape = 's32[1]{0}', space=sflag, size = 0x4, scoped, tag = 'scoped memory for tpu_custom_call.1']
    %14 = vsyncpa [#allocation3], 0
    // Predicated region
    $region2: #{tpu_custom_call.1} parent=1 // pred_check
      _
    $region3: #{tpu_custom_call.1} parent=1 // pred_check_branch
      %16 = sbr.rel (0) target = $region5
    $region4: #{tpu_custom_call.1} parent=1 // pred_region
      _
    $region5: #{tpu_custom_call.1} parent=1 // pred_fallthru
      _
    // Predicated region
    $region6: #{tpu_custom_call.1} parent=1 // pred_check
      _
    $region7: #{tpu_custom_call.1} parent=1 // pred_check_branch
      %18 = sbr.rel (0) target = $region9
    $region8: #{tpu_custom_call.1} parent=1 // pred_region
      _
    $region9: #{tpu_custom_call.1} parent=1 // pred_fallthru
      _
    // Predicated region
    $region10: #{tpu_custom_call.1} parent=1 // pred_check
      _
    $region11: #{tpu_custom_call.1} parent=1 // pred_check_branch
      %20 = sbr.rel (0) target = $region13
    $region12: #{tpu_custom_call.1} parent=1 // pred_region
      _
    $region13: #{tpu_custom_call.1} parent=1 // pred_fallthru
      _
    // Predicated region
    $region14: #{tpu_custom_call.1} parent=1 // pred_check
      _
    $region15: #{tpu_custom_call.1} parent=1 // pred_check_branch
      %22 = sbr.rel (0) target = $region17
    $region16: #{tpu_custom_call.1} parent=1 // pred_region
      _
    $region17: #{tpu_custom_call.1} parent=1 // pred_fallthru
      _
    // Predicated region
    $region18: #{tpu_custom_call.1} parent=1 // pred_check
      _
    $region19: #{tpu_custom_call.1} parent=1 // pred_check_branch
      %24 = sbr.rel (0) target = $region21
    $region20: #{tpu_custom_call.1} parent=1 // pred_region
      _
    $region21: #{tpu_custom_call.1} parent=1 // pred_fallthru
      _
    // Predicated region
    $region22: #{tpu_custom_call.1} parent=1 // pred_check
      _
    $region23: #{tpu_custom_call.1} parent=1 // pred_check_branch
      %26 = sbr.rel (0) target = $region25
    $region24: #{tpu_custom_call.1} parent=1 // pred_region
      _
    $region25: #{tpu_custom_call.1} parent=1 // pred_fallthru
      _
    // Predicated region
    $region26: #{tpu_custom_call.1} parent=1 // pred_check
      _
    $region27: #{tpu_custom_call.1} parent=1 // pred_check_branch
      %28 = sbr.rel (0) target = $region29
    $region28: #{tpu_custom_call.1} parent=1 // pred_region
      _
    $region29: #{tpu_custom_call.1} parent=1 // pred_fallthru
      _
    // Predicated region
    $region30: #{tpu_custom_call.1} parent=1 // pred_check
      _
    $region31: #{tpu_custom_call.1} parent=1 // pred_check_branch
      %30 = sbr.rel (0) target = $region33
    $region32: #{tpu_custom_call.1} parent=1 // pred_region
      _
    $region33: #{tpu_custom_call.1} parent=1 // pred_fallthru
      _
    // Predicated region
    $region34: #{tpu_custom_call.1} parent=1 // pred_check
      _
    $region35: #{tpu_custom_call.1} parent=1 // pred_check_branch
      %32 = sbr.rel (0) target = $region37
    $region36: #{tpu_custom_call.1} parent=1 // pred_region
      _
    $region37: #{tpu_custom_call.1} parent=1 // pred_fallthru
      _
    %v34 = vld [vmem:[%s0] sm:$0xf]
    %v35 = vld [vmem:[%s1] sm:$0xf]
    %v36 = vld [vmem:[%s1 + $0x4] sm:$0xf]
    %v37 = vld [vmem:[%s1 + $0x8] sm:$0xf]
    %v38 = vld [vmem:[%s1 + $0xc] sm:$0xf]
    %v39 = vld [vmem:[%s2] sm:$0x1]
    %v41 = vlaneseq
    %v42 = vshrl.u32 %v41, 7
    %v43 = vsub.s32 0, %v42
    %v44 = vrot.slane %v39, %v43
    %v50 = vunpack.c.l.b16 %v35
    %v51 = vunpack.c.l.b16 %v36
    %v52 = vunpack.c.l.b16 %v37
    %v53 = vunpack.c.l.b16 %v38
    %v54 = vpack.c.b16 %v51, %v50
    %v55 = vpack.c.b16 %v53, %v52
    %vm58 = vcmask 261120
    %v60 = vsel %vm58, %v34, 0
    %62 = vmatprep.subr.bf16.mxu0 0
    %63 = vmatpush1.bf16.msra.mxu0 %v54
    %64 = vmatprep.subr.bf16.mxu0 0
    %65 = vmatpush1.bf16.msra.mxu0 %v55
    %66 = vmatprep.subr.bf16.mxu0 0
    %67 = vmatpush1.bf16.msra.mxu0 0
    %68 = vmatprep.subr.bf16.mxu0 0
    %69 = vmatpush1.bf16.msra.mxu0 0
    %70 = vmatprep.subr.bf16.mxu0 0
    %71 = vmatpush1.bf16.msra.mxu0 0
    %72 = vmatprep.subr.bf16.mxu0 0
    %73 = vmatpush1.bf16.msra.mxu0 0
    %74 = vmatprep.subr.bf16.mxu0 0
    %75 = vmatpush1.bf16.msra.mxu0 0
    %76 = vmatprep.subr.bf16.mxu0 0
    %77 = vmatpush1.bf16.msra.mxu0 0
    %78 = vmatprep.subr.bf16.mxu0 0
    %79 = vmatpush1.bf16.msra.mxu0 0
    %80 = vmatprep.subr.bf16.mxu0 0
    %81 = vmatpush1.bf16.msra.mxu0 0
    %82 = vmatprep.subr.bf16.mxu0 0
    %83 = vmatpush1.bf16.msra.mxu0 0
    %84 = vmatprep.subr.bf16.mxu0 0
    %85 = vmatpush1.bf16.msra.mxu0 0
    %86 = vmatprep.subr.bf16.mxu0 0
    %87 = vmatpush1.bf16.msra.mxu0 0
    %88 = vmatprep.subr.bf16.mxu0 0
    %89 = vmatpush1.bf16.msra.mxu0 0
    %90 = vmatprep.subr.bf16.mxu0 0
    %91 = vmatpush1.bf16.msra.mxu0 0
    %92 = vmatprep.subr.bf16.mxu0 0
    %93 = vmatpush1.bf16.msra.mxu0 0
    %94 = vmatprep.mubr.bf16.mxu0 0
    %95 = vmatmul.mubr.bf16.gmra.mrb[0].mxu0 %v60
    %v96 = vpop.f32.mrb[0].mxu0
    %v97 = vadd.f32 %v44, %v96
    %v98 = vpop.f32.mrb[0].mxu0
    %v99 = vpop.f32.mrb[0].mxu0
    %v100 = vpop.f32.mrb[0].mxu0
    %101 = vdwg.mxu0
    %v102 = vmax.f32 %v97, 0.0
    %v103 = vpack.c.bf16 %v102, %v102
    %v104 = vld [vmem:[%s3] sm:$0xf]
    %v105 = vld [vmem:[%s3 + $0x4] sm:$0xf]
    %v106 = vld [vmem:[%s3 + $0x8] sm:$0xf]
    %v107 = vld [vmem:[%s3 + $0xc] sm:$0xf]
    %v108 = vld [vmem:[%s3 + $0x10] sm:$0xf]
    %v109 = vld [vmem:[%s3 + $0x14] sm:$0xf]
    %v110 = vld [vmem:[%s3 + $0x18] sm:$0xf]
    %v111 = vld [vmem:[%s3 + $0x1c] sm:$0xf]
    %v112 = vld [vmem:[%s4] sm:$0x1]
    %v114 = vlaneseq
    %v115 = vshrl.u32 %v114, 7
    %v116 = vsub.s32 0, %v115
    %v117 = vrot.slane %v112, %v116
    %v127 = vunpack.c.l.b16 %v104
    %v128 = vunpack.c.l.b16 %v105
    %v129 = vunpack.c.l.b16 %v106
    %v130 = vunpack.c.l.b16 %v107
    %v131 = vunpack.c.l.b16 %v108
    %v132 = vunpack.c.l.b16 %v109
    %v133 = vunpack.c.l.b16 %v110
    %v134 = vunpack.c.l.b16 %v111
    %v135 = vpack.c.b16 %v128, %v127
    %v136 = vpack.c.b16 %v130, %v129
    %v137 = vpack.c.b16 %v132, %v131
    %v138 = vpack.c.b16 %v134, %v133
    %vm143 = vcmask 523264
    %v145 = vsel %vm143, %v103, 0
    %147 = vmatprep.subr.bf16.mxu0 0
    %148 = vmatpush1.bf16.msra.mxu0 %v135
    %149 = vmatprep.subr.bf16.mxu0 0
    %150 = vmatpush1.bf16.msra.mxu0 %v136
    %151 = vmatprep.subr.bf16.mxu0 0
    %152 = vmatpush1.bf16.msra.mxu0 %v137
    %153 = vmatprep.subr.bf16.mxu0 0
    %154 = vmatpush1.bf16.msra.mxu0 %v138
    %155 = vmatprep.subr.bf16.mxu0 0
    %156 = vmatpush1.bf16.msra.mxu0 0
    %157 = vmatprep.subr.bf16.mxu0 0
    %158 = vmatpush1.bf16.msra.mxu0 0
    %159 = vmatprep.subr.bf16.mxu0 0
    %160 = vmatpush1.bf16.msra.mxu0 0
    %161 = vmatprep.subr.bf16.mxu0 0
    %162 = vmatpush1.bf16.msra.mxu0 0
    %163 = vmatprep.subr.bf16.mxu0 0
    %164 = vmatpush1.bf16.msra.mxu0 0
    %165 = vmatprep.subr.bf16.mxu0 0
    %166 = vmatpush1.bf16.msra.mxu0 0
    %167 = vmatprep.subr.bf16.mxu0 0
    %168 = vmatpush1.bf16.msra.mxu0 0
    %169 = vmatprep.subr.bf16.mxu0 0
    %170 = vmatpush1.bf16.msra.mxu0 0
    %171 = vmatprep.subr.bf16.mxu0 0
    %172 = vmatpush1.bf16.msra.mxu0 0
    %173 = vmatprep.subr.bf16.mxu0 0
    %174 = vmatpush1.bf16.msra.mxu0 0
    %175 = vmatprep.subr.bf16.mxu0 0
    %176 = vmatpush1.bf16.msra.mxu0 0
    %177 = vmatprep.subr.bf16.mxu0 0
    %178 = vmatpush1.bf16.msra.mxu0 0
    %179 = vmatprep.mubr.bf16.mxu0 0
    %180 = vmatmul.mubr.bf16.gmra.mrb[0].mxu0 %v145
    %v181 = vpop.f32.mrb[0].mxu0
    %v182 = vadd.f32 %v117, %v181
    %v183 = vpop.f32.mrb[0].mxu0
    %v184 = vpop.f32.mrb[0].mxu0
    %v185 = vpop.f32.mrb[0].mxu0
    %186 = vdwg.mxu0
    %v187 = vmax.f32 %v182, 0.0
    %v188 = vpack.c.bf16 %v187, %v187
    %v189 = vld [vmem:[%s5] sm:$0xf]
    %v190 = vld [vmem:[%s5 + $0x4] sm:$0xf]
    %v191 = vld [vmem:[%s5 + $0x8] sm:$0xf]
    %v192 = vld [vmem:[%s5 + $0xc] sm:$0xf]
    %v193 = vld [vmem:[%s5 + $0x10] sm:$0xf]
    %v194 = vld [vmem:[%s5 + $0x14] sm:$0xf]
    %v195 = vld [vmem:[%s5 + $0x18] sm:$0xf]
    %v196 = vld [vmem:[%s5 + $0x1c] sm:$0xf]
    %v197 = vld [vmem:[%s6] sm:$0x1]
    %v199 = vlaneseq
    %v200 = vshrl.u32 %v199, 7
    %v201 = vsub.s32 0, %v200
    %v202 = vrot.slane %v197, %v201
    %v212 = vunpack.c.l.b16 %v189
    %v213 = vunpack.c.l.b16 %v190
    %v214 = vunpack.c.l.b16 %v191
    %v215 = vunpack.c.l.b16 %v192
    %v216 = vunpack.c.l.b16 %v193
    %v217 = vunpack.c.l.b16 %v194
    %v218 = vunpack.c.l.b16 %v195
    %v219 = vunpack.c.l.b16 %v196
    %v220 = vpack.c.b16 %v213, %v212
    %v221 = vpack.c.b16 %v215, %v214
    %v222 = vpack.c.b16 %v217, %v216
    %v223 = vpack.c.b16 %v219, %v218
    %v229 = vsel %vm143, %v188, 0
    %231 = vmatprep.subr.bf16.mxu0 0
    %232 = vmatpush1.bf16.msra.mxu0 %v220
    %233 = vmatprep.subr.bf16.mxu0 0
    %234 = vmatpush1.bf16.msra.mxu0 %v221
    %235 = vmatprep.subr.bf16.mxu0 0
    %236 = vmatpush1.bf16.msra.mxu0 %v222
    %237 = vmatprep.subr.bf16.mxu0 0
    %238 = vmatpush1.bf16.msra.mxu0 %v223
    %239 = vmatprep.subr.bf16.mxu0 0
    %240 = vmatpush1.bf16.msra.mxu0 0
    %241 = vmatprep.subr.bf16.mxu0 0
    %242 = vmatpush1.bf16.msra.mxu0 0
    %243 = vmatprep.subr.bf16.mxu0 0
    %244 = vmatpush1.bf16.msra.mxu0 0
    %245 = vmatprep.subr.bf16.mxu0 0
    %246 = vmatpush1.bf16.msra.mxu0 0
    %247 = vmatprep.subr.bf16.mxu0 0
    %248 = vmatpush1.bf16.msra.mxu0 0
    %249 = vmatprep.subr.bf16.mxu0 0
    %250 = vmatpush1.bf16.msra.mxu0 0
    %251 = vmatprep.subr.bf16.mxu0 0
    %252 = vmatpush1.bf16.msra.mxu0 0
    %253 = vmatprep.subr.bf16.mxu0 0
    %254 = vmatpush1.bf16.msra.mxu0 0
    %255 = vmatprep.subr.bf16.mxu0 0
    %256 = vmatpush1.bf16.msra.mxu0 0
    %257 = vmatprep.subr.bf16.mxu0 0
    %258 = vmatpush1.bf16.msra.mxu0 0
    %259 = vmatprep.subr.bf16.mxu0 0
    %260 = vmatpush1.bf16.msra.mxu0 0
    %261 = vmatprep.subr.bf16.mxu0 0
    %262 = vmatpush1.bf16.msra.mxu0 0
    %263 = vmatprep.mubr.bf16.mxu0 0
    %264 = vmatmul.mubr.bf16.gmra.mrb[0].mxu0 %v229
    %v265 = vpop.f32.mrb[0].mxu0
    %v266 = vadd.f32 %v202, %v265
    %v267 = vpop.f32.mrb[0].mxu0
    %v268 = vpop.f32.mrb[0].mxu0
    %v269 = vpop.f32.mrb[0].mxu0
    %270 = vdwg.mxu0
    %v271 = vmax.f32 %v266, 0.0
    %v272 = vpack.c.bf16 %v271, %v271
    %v273 = vld [vmem:[%s7] sm:$0xf]
    %v274 = vld [vmem:[%s7 + $0x4] sm:$0xf]
    %v275 = vld [vmem:[%s7 + $0x8] sm:$0xf]
    %v276 = vld [vmem:[%s7 + $0xc] sm:$0xf]
    %v277 = vld [vmem:[%s8] sm:$0x1]
    %v279 = vlaneseq
    %v280 = vshrl.u32 %v279, 7
    %v281 = vsub.s32 0, %v280
    %v282 = vrot.slane %v277, %v281
    %v288 = vunpack.c.l.b16 %v273
    %v289 = vunpack.c.l.b16 %v274
    %v290 = vunpack.c.l.b16 %v275
    %v291 = vunpack.c.l.b16 %v276
    %v292 = vpack.c.b16 %v289, %v288
    %v293 = vpack.c.b16 %v291, %v290
    %v297 = vsel %vm58, %v272, 0
    %299 = vmatprep.subr.bf16.mxu0 0
    %300 = vmatpush1.bf16.msra.mxu0 %v292
    %301 = vmatprep.subr.bf16.mxu0 0
    %302 = vmatpush1.bf16.msra.mxu0 %v293
    %303 = vmatprep.subr.bf16.mxu0 0
    %304 = vmatpush1.bf16.msra.mxu0 0
    %305 = vmatprep.subr.bf16.mxu0 0
    %306 = vmatpush1.bf16.msra.mxu0 0
    %307 = vmatprep.subr.bf16.mxu0 0
    %308 = vmatpush1.bf16.msra.mxu0 0
    %309 = vmatprep.subr.bf16.mxu0 0
    %310 = vmatpush1.bf16.msra.mxu0 0
    %311 = vmatprep.subr.bf16.mxu0 0
    %312 = vmatpush1.bf16.msra.mxu0 0
    %313 = vmatprep.subr.bf16.mxu0 0
    %314 = vmatpush1.bf16.msra.mxu0 0
    %315 = vmatprep.subr.bf16.mxu0 0
    %316 = vmatpush1.bf16.msra.mxu0 0
    %317 = vmatprep.subr.bf16.mxu0 0
    %318 = vmatpush1.bf16.msra.mxu0 0
    %319 = vmatprep.subr.bf16.mxu0 0
    %320 = vmatpush1.bf16.msra.mxu0 0
    %321 = vmatprep.subr.bf16.mxu0 0
    %322 = vmatpush1.bf16.msra.mxu0 0
    %323 = vmatprep.subr.bf16.mxu0 0
    %324 = vmatpush1.bf16.msra.mxu0 0
    %325 = vmatprep.subr.bf16.mxu0 0
    %326 = vmatpush1.bf16.msra.mxu0 0
    %327 = vmatprep.subr.bf16.mxu0 0
    %328 = vmatpush1.bf16.msra.mxu0 0
    %329 = vmatprep.subr.bf16.mxu0 0
    %330 = vmatpush1.bf16.msra.mxu0 0
    %331 = vmatprep.mubr.bf16.mxu0 0
    %332 = vmatmul.mubr.bf16.gmra.mrb[0].mxu0 %v297
    %v333 = vpop.f32.mrb[0].mxu0
    %v334 = vadd.f32 %v282, %v333
    %v335 = vpop.f32.mrb[0].mxu0
    %v336 = vpop.f32.mrb[0].mxu0
    %v337 = vpop.f32.mrb[0].mxu0
    %338 = vdwg.mxu0
    %vm339 = vcmask 130048
    %340 = vst.msk [vmem:[#allocation2] sm:$0xff] %vm339, %v334
    // Predicated region
    $region38: #{tpu_custom_call.1} parent=1 // pred_check
      _
    $region39: #{tpu_custom_call.1} parent=1 // pred_check_branch
      %342 = sbr.rel (0) target = $region41
    $region40: #{tpu_custom_call.1} parent=1 // pred_region
      %s344 = ssub.s32 128, 128
      %345 = vsyncadd [#allocation3], %s344
      %s347 = sshll.u32 [#allocation2], 4
      %s348 = int_to_ptr.vmem [resolvable:$true] %s347
      %350 = dma.vmem_to_hbm [thread:$0]  %s348, 128, %s9, [#allocation3]
    $region41: #{tpu_custom_call.1} parent=1 // pred_fallthru
      _
    // Predicated region
    $region42: #{tpu_custom_call.1} parent=1 // pred_check
      _
    $region43: #{tpu_custom_call.1} parent=1 // pred_check_branch
      %352 = sbr.rel (0) target = $region45
    $region44: #{tpu_custom_call.1} parent=1 // pred_region
      %353 = dma.done [#allocation3], 128
    $region45: #{tpu_custom_call.1} parent=1 // pred_fallthru
      _
    %354 = vsyncpa [#allocation3], 1

</llo_original>
